<compile_context>
chip_gen: v7x
topology: tpu7x:2x2x1
jax: 0.10.0
libtpu: 0.0.40
codegen_flags: <defaults>
</compile_context>

<pallas_src>
import math
from functools import partial

import jax
import jax.numpy as jnp
from jax.experimental import pallas as pl
from jax.experimental.pallas import tpu as pltpu


# ----------------------------- tiling helper --------------------------------

def _pick_tile(dim, target, align):
    """Largest `align`-multiple divisor of `dim` that is <= target (or dim itself)."""
    if dim <= target:
        return dim
    t = (target // align) * align
    for cand in range(t, 0, -align):
        if dim % cand == 0:
            return cand
    return dim


# ----------------------------- Pallas kernels ------------------------------

def _ln_linear_kernel(*refs, has_bias, activation):
    """Fused LayerNorm -> matmul (-> bias -> GELU).

    LN is computed once per row block under pl.when(j == 0) into a bf16 scratch
    (the x block is resident across the inner N-tile axis) and reused for every
    N tile -- avoids recomputing mean/var/rsqrt N/tn times.
    """
    if has_bias:
        x_ref, g_ref, beta_ref, w_ref, bias_ref, o_ref, h_ref = refs
    else:
        x_ref, g_ref, beta_ref, w_ref, o_ref, h_ref = refs
        bias_ref = None

    @pl.when(pl.program_id(1) == 0)
    def _():
        x = x_ref[...]                                   # (tm, K) f32
        mu = jnp.mean(x, axis=-1, keepdims=True)
        xc = x - mu
        var = jnp.mean(xc * xc, axis=-1, keepdims=True)
        h = (xc * jax.lax.rsqrt(var + 1e-5)) * g_ref[...] + beta_ref[...]
        h_ref[...] = h.astype(jnp.bfloat16)

    out = jnp.dot(h_ref[...], w_ref[...].astype(jnp.bfloat16),
                  preferred_element_type=jnp.float32)     # (tm, tn) f32

    if bias_ref is not None:
        out = out + bias_ref[...]
    if activation == "gelu":
        c = 0.7978845608028654                            # sqrt(2/pi), tanh approximation
        out = 0.5 * out * (1.0 + jnp.tanh(c * (out + 0.044715 * out * out * out)))
    o_ref[...] = out.astype(o_ref.dtype)


def _matmul_resid_fullk_kernel(x_ref, w_ref, bias_ref, r_ref, o_ref):
    """Single-K-block matmul: no accumulator scratch, bias + residual fused."""
    out = jnp.dot(x_ref[...].astype(jnp.bfloat16), w_ref[...].astype(jnp.bfloat16),
                  preferred_element_type=jnp.float32)
    o_ref[...] = (out + bias_ref[...] + r_ref[...]).astype(o_ref.dtype)


def _matmul_resid_kernel(x_ref, w_ref, bias_ref, r_ref, o_ref, acc_ref):
    """K-tiled matmul with f32 accumulator; bias + residual fused into writeback."""
    k = pl.program_id(2)

    @pl.when(k == 0)
    def _():
        acc_ref[...] = jnp.zeros_like(acc_ref)

    acc_ref[...] += jnp.dot(x_ref[...].astype(jnp.bfloat16),
                            w_ref[...].astype(jnp.bfloat16),
                            preferred_element_type=jnp.float32)

    @pl.when(k == pl.num_programs(2) - 1)
    def _():
        o_ref[...] = (acc_ref[...] + bias_ref[...] + r_ref[...]).astype(o_ref.dtype)


def _flash_attn_kernel(qi_map_ref, ki_map_ref, q_ref, k_ref, v_ref, o_ref,
                       m_ref, l_ref, acc_ref, *, n_head, d_head, tq):
    """Flash-style causal attention over a triangular (qi, ki <= qi) step list.

    q_ref/k_ref/v_ref are (1, tq, C) bf16 column-slices of the (B, T, 3C) qkv
    tensor selected via the BlockSpec index_map.  acc is a lane-dense (tq, C)
    f32 slab (heads at lane offsets h*d_head); output is one bulk bf16 store.
    The 1/sqrt(d_head) scale is already folded into the Q projection weights.
    """
    step = pl.program_id(1)
    qi = qi_map_ref[step]
    ki = ki_map_ref[step]

    @pl.when(ki == 0)
    def _():
        m_ref[...] = jnp.full_like(m_ref, -jnp.inf)
        l_ref[...] = jnp.zeros_like(l_ref)
        acc_ref[...] = jnp.zeros_like(acc_ref)

    # TODO(synk): at real GPT-2 scale (n_head=12) check the bundle dump for vreg
    # spills from this fully-unrolled head loop; switch to lax.fori_loop(unroll=2)
    # over the head index if spills show up.
    def process(masked):
        q = q_ref[0]                                      # (tq, C) bf16
        k = k_ref[0]
        v = v_ref[0]
        if masked:                                        # diagonal block only
            row = jax.lax.broadcasted_iota(jnp.int32, (tq, tq), 0)
            col = jax.lax.broadcasted_iota(jnp.int32, (tq, tq), 1)
            mask = col <= row
        for h in range(n_head):
            sl = slice(h * d_head, (h + 1) * d_head)
            s = jax.lax.dot_general(q[:, sl], k[:, sl], (((1,), (1,)), ((), ())),
                                    preferred_element_type=jnp.float32)   # (tq, tq)
            if masked:
                s = jnp.where(mask, s, -jnp.inf)
            m_prev = m_ref[h]                             # (tq, 1)
            m_new = jnp.maximum(m_prev, jnp.max(s, axis=-1, keepdims=True))
            alpha = jnp.exp(m_prev - m_new)
            p = jnp.exp(s - m_new)
            l_ref[h] = alpha * l_ref[h] + jnp.sum(p, axis=-1, keepdims=True)
            acc_ref[:, sl] = alpha * acc_ref[:, sl] + jnp.dot(
                p.astype(jnp.bfloat16), v[:, sl], preferred_element_type=jnp.float32)
            m_ref[h] = m_new

    @pl.when(ki < qi)
    def _():
        process(masked=False)                             # interior: no mask work

    @pl.when(ki == qi)
    def _():
        process(masked=True)                              # diagonal: masked, then finalize
        for h in range(n_head):
            sl = slice(h * d_head, (h + 1) * d_head)
            acc_ref[:, sl] = acc_ref[:, sl] * pl.reciprocal(l_ref[h], approx=True)
        o_ref[0] = acc_ref[...].astype(o_ref.dtype)       # lane-dense bulk store


# ----------------------------- Pallas wrappers ------------------------------

def pallas_ln_linear(x, gamma, beta, w, bias=None, activation=None,
                     out_dtype=jnp.bfloat16, tm_target=256, tn_target=768):
    """y = LN(x) @ W (+ b) (+ GELU).  W is (K, N) bf16; output dtype selectable."""
    M, K = x.shape
    assert w.shape[0] == K
    N = w.shape[1]

    tm = _pick_tile(M, tm_target, 8)
    tn = _pick_tile(N, tn_target, 128)
    grid = (M // tm, N // tn)

    in_specs = [
        pl.BlockSpec((tm, K), lambda i, j: (i, 0)),
        pl.BlockSpec((1, K), lambda i, j: (0, 0)),
        pl.BlockSpec((1, K), lambda i, j: (0, 0)),
        pl.BlockSpec((K, tn), lambda i, j: (0, j)),
    ]
    args = [x, gamma.reshape(1, K), beta.reshape(1, K), w]
    if bias is not None:
        in_specs.append(pl.BlockSpec((1, tn), lambda i, j: (0, j)))
        args.append(bias.reshape(1, N))

    kernel = partial(_ln_linear_kernel, has_bias=bias is not None,
                     activation=activation)
    flops = 2 * M * N * K
    transc = M * N if activation == "gelu" else M
    bytes_acc = int(x.dtype.itemsize * M * K + w.dtype.itemsize * N * K
                    + jnp.dtype(out_dtype).itemsize * M * N)

    return pl.pallas_call(
        kernel,
        out_shape=jax.ShapeDtypeStruct((M, N), out_dtype),
        grid=grid,
        in_specs=in_specs,
        out_specs=pl.BlockSpec((tm, tn), lambda i, j: (i, j)),
        scratch_shapes=[pltpu.VMEM((tm, K), jnp.bfloat16)],   # LN result, reused over j
        compiler_params=pltpu.CompilerParams(
            dimension_semantics=("parallel", "arbitrary")),   # j carries the LN scratch
        cost_estimate=pl.CostEstimate(flops=flops, transcendentals=transc,
                                      bytes_accessed=bytes_acc),
    )(*args)


def pallas_linear_residual(x, w, bias, residual,
                           tm_target=256, tn_target=512,
                           full_k_max=1024, tk_target=512):
    """y = x @ W + b + residual (f32 output).  Drops K-tiling when K fits VMEM."""
    M, K = x.shape
    N = w.shape[1]
    tm = _pick_tile(M, tm_target, 8)
    tn = _pick_tile(N, tn_target, 128)
    bias2 = bias.reshape(1, N)
    bytes_acc = int(x.dtype.itemsize * M * K + w.dtype.itemsize * K * N + 8 * M * N)
    cost = pl.CostEstimate(flops=2 * M * N * K, transcendentals=0,
                           bytes_accessed=bytes_acc)

    if K <= full_k_max:
        grid = (M // tm, N // tn)
        return pl.pallas_call(
            _matmul_resid_fullk_kernel,
            out_shape=jax.ShapeDtypeStruct((M, N), jnp.float32),
            grid=grid,
            in_specs=[
                pl.BlockSpec((tm, K), lambda i, j: (i, 0)),
                pl.BlockSpec((K, tn), lambda i, j: (0, j)),
                pl.BlockSpec((1, tn), lambda i, j: (0, j)),
                pl.BlockSpec((tm, tn), lambda i, j: (i, j)),
            ],
            out_specs=pl.BlockSpec((tm, tn), lambda i, j: (i, j)),
            compiler_params=pltpu.CompilerParams(
                dimension_semantics=("parallel", "parallel")),
            cost_estimate=cost,
        )(x, w, bias2, residual)

    tk = _pick_tile(K, tk_target, 128)
    grid = (M // tm, N // tn, K // tk)
    return pl.pallas_call(
        _matmul_resid_kernel,
        out_shape=jax.ShapeDtypeStruct((M, N), jnp.float32),
        grid=grid,
        in_specs=[
            pl.BlockSpec((tm, tk), lambda i, j, k: (i, k)),
            pl.BlockSpec((tk, tn), lambda i, j, k: (k, j)),
            pl.BlockSpec((1, tn), lambda i, j, k: (0, j)),
            pl.BlockSpec((tm, tn), lambda i, j, k: (i, j)),
        ],
        out_specs=pl.BlockSpec((tm, tn), lambda i, j, k: (i, j)),
        scratch_shapes=[pltpu.VMEM((tm, tn), jnp.float32)],
        compiler_params=pltpu.CompilerParams(
            dimension_semantics=("parallel", "parallel", "arbitrary")),
        cost_estimate=cost,
    )(x, w, bias2, residual)


def pallas_causal_attention(qkv, n_head, tile_target=256):
    """qkv: (B, T, 3C) bf16 -> (B, T, C) bf16 causal MHA over a triangular grid."""
    B, T, C3 = qkv.shape
    C = C3 // 3
    d_head = C // n_head
    assert C % 128 == 0, "n_embd must be a multiple of 128 for lane-aligned head slicing"
    tq = _pick_tile(T, tile_target, 8)
    nq = T // tq

    # Triangular step list: only (qi, ki) blocks with ki <= qi are ever visited,
    # so fully-masked K/V blocks are never DMA'd.
    qi_list, ki_list = [], []
    for qi in range(nq):
        for ki in range(qi + 1):
            qi_list.append(qi)
            ki_list.append(ki)
    qi_map = jnp.asarray(qi_list, dtype=jnp.int32)
    ki_map = jnp.asarray(ki_list, dtype=jnp.int32)
    n_steps = len(qi_list)

    kernel = partial(_flash_attn_kernel, n_head=n_head, d_head=d_head, tq=tq)
    flops = int(2 * 2 * B * n_steps * n_head * tq * tq * d_head)
    transc = int(B * n_steps * n_head * tq * tq)
    bytes_acc = int(3 * B * n_steps * tq * C * 2 + B * T * C * 2)

    return pl.pallas_call(
        kernel,
        out_shape=jax.ShapeDtypeStruct((B, T, C), jnp.bfloat16),
        grid_spec=pltpu.PrefetchScalarGridSpec(
            num_scalar_prefetch=2,
            grid=(B, n_steps),
            in_specs=[
                pl.BlockSpec((1, tq, C), lambda b, s, qi_m, ki_m: (b, qi_m[s], 0)),  # q cols
                pl.BlockSpec((1, tq, C), lambda b, s, qi_m, ki_m: (b, ki_m[s], 1)),  # k cols
                pl.BlockSpec((1, tq, C), lambda b, s, qi_m, ki_m: (b, ki_m[s], 2)),  # v cols
            ],
            out_specs=pl.BlockSpec((1, tq, C), lambda b, s, qi_m, ki_m: (b, qi_m[s], 0)),
            scratch_shapes=[
                pltpu.VMEM((n_head, tq, 1), jnp.float32),   # running max
                pltpu.VMEM((n_head, tq, 1), jnp.float32),   # running sum
                pltpu.VMEM((tq, C), jnp.float32),           # lane-dense running output
            ]),
        compiler_params=pltpu.CompilerParams(
            dimension_semantics=("parallel", "arbitrary")),
        cost_estimate=pl.CostEstimate(flops=flops, transcendentals=transc,
                                      bytes_accessed=bytes_acc),
    )(qi_map, ki_map, qkv, qkv, qkv)


# ----------------------------- GPT forward ----------------------------------

def gpt_forward(params, cfg, idx, targets=None):
    B, T = idx.shape
    assert T <= cfg["block_size"]
    C = cfg["n_embd"]
    n_head = cfg["n_head"]
    V = cfg["vocab_size"]

    # TODO(synk): token/positional embedding gather kept as plain-JAX glue
    # (data-dependent gather; a Pallas version would need manual DMA gather).
    tok_emb = params["wte"][idx].astype(jnp.float32)          # (B, T, C)
    pos_emb = params["wpe"][:T].astype(jnp.float32)           # (T, C)
    x = (tok_emb + pos_emb[None, :, :]).reshape(B * T, C)     # residual stream stays f32

    for blk in params["blocks"]:
        # ---- attention sub-block: LN1 + QKV fused (bf16 out), flash attention,
        #      proj + residual fused (f32 residual stream)
        qkv = pallas_ln_linear(x, blk["ln1_g"], blk["ln1_b"],
                               blk["attn_w"], blk["attn_b"])            # (B*T, 3C) bf16
        y = pallas_causal_attention(qkv.reshape(B, T, 3 * C), n_head)   # (B, T, C) bf16
        x = pallas_linear_residual(y.reshape(B * T, C),
                                   blk["proj_w"], blk["proj_b"], x)     # f32

        # ---- MLP sub-block: LN2 + FC + GELU fused (bf16 out), mproj + residual fused
        h = pallas_ln_linear(x, blk["ln2_g"], blk["ln2_b"],
                             blk["fc_w"], blk["fc_b"], activation="gelu")  # bf16
        x = pallas_linear_residual(h, blk["mproj_w"], blk["mproj_b"], x)   # f32

    # final LN fused with (tied) lm_head: contracts the one-time transposed
    # (C, V_pad) copy of wte (no bias, no per-tile weight transpose), f32 logits.
    logits = pallas_ln_linear(x, params["lnf_g"], params["lnf_b"],
                              params["lm_head_w"], bias=None,
                              out_dtype=jnp.float32)                    # (B*T, V_pad)
    logits = logits[:, :V].reshape(B, T, V)

    loss = None
    if targets is not None:
        # TODO(synk): cross-entropy kept in plain JAX glue
        logp = jax.nn.log_softmax(logits, axis=-1)
        loss = -jnp.mean(jnp.take_along_axis(logp, targets[..., None], axis=-1))
    return logits, loss


# ----------------------------- param init -----------------------------------

def init_params(key, cfg):
    C = cfg["n_embd"]
    V = cfg["vocab_size"]
    V_pad = ((V + 127) // 128) * 128      # pad vocab so lm_head N always tiles (50257 -> 50304)
    L = cfg["n_layer"]
    BS = cfg["block_size"]
    n_head = cfg["n_head"]
    d_head = C // n_head
    qscale = 1.0 / math.sqrt(d_head)

    def nrm_f32(k, shape):
        return 0.02 * jax.random.normal(k, shape, dtype=jnp.float32)

    keys = jax.random.split(key, 2 + L)
    wte = nrm_f32(keys[0], (V_pad, C)).astype(jnp.bfloat16)   # tied with lm_head
    params = {
        "wte": wte,
        # one-time transposed copy so the lm_head uses the normal (K, tn) path
        "lm_head_w": jnp.transpose(wte),                      # (C, V_pad) bf16
        "wpe": nrm_f32(keys[1], (BS, C)),
        "blocks": [],
        "lnf_g": jnp.ones((C,), jnp.float32),
        "lnf_b": jnp.zeros((C,), jnp.float32),
    }
    for l in range(L):
        k0, k1, k2, k3 = jax.random.split(keys[2 + l], 4)
        # fold 1/sqrt(d_head) into the Q columns of the QKV projection (and its bias)
        attn_w = nrm_f32(k0, (C, 3 * C))
        attn_w = attn_w.at[:, :C].multiply(qscale)
        attn_b = jnp.zeros((3 * C,), jnp.float32)
        attn_b = attn_b.at[:C].multiply(qscale)
        params["blocks"].append(
            dict(
                ln1_g=jnp.ones((C,), jnp.float32),
                ln1_b=jnp.zeros((C,), jnp.float32),
                attn_w=attn_w.astype(jnp.bfloat16),
                attn_b=attn_b,
                proj_w=nrm_f32(k1, (C, C)).astype(jnp.bfloat16),
                proj_b=jnp.zeros((C,), jnp.float32),
                ln2_g=jnp.ones((C,), jnp.float32),
                ln2_b=jnp.zeros((C,), jnp.float32),
                fc_w=nrm_f32(k2, (C, 4 * C)).astype(jnp.bfloat16),
                fc_b=jnp.zeros((4 * C,), jnp.float32),
                mproj_w=nrm_f32(k3, (4 * C, C)).astype(jnp.bfloat16),
                mproj_b=jnp.zeros((C,), jnp.float32),
            )
        )
    return params


# ----------------------------- main ------------------------------------------

if __name__ == "__main__":
    # small shapes consistent with the GPT module (n_embd kept a multiple of 128)
    cfg = dict(block_size=16, vocab_size=256, n_layer=2, n_head=4, n_embd=128)
    root = jax.random.PRNGKey(0)
    pkey, dkey = jax.random.split(root)
    params = init_params(pkey, cfg)

    B, T = 2, 16
    idx = jax.random.randint(dkey, (B, T), 0, cfg["vocab_size"], dtype=jnp.int32)

    logits, loss = gpt_forward(params, cfg, idx, targets=None)
    jax.block_until_ready(logits)
    assert logits.shape == (B, T, cfg["vocab_size"])
    print("KERNEL_OK")
</pallas_src>

<mosaic_0001>
module attributes {stable_mosaic.version = 11 : i64} {
  func.func @_ln_linear_kernel(%arg0: i32, %arg1: i32, %arg2: memref<32x128xf32, #tpu.memory_space<vmem>>, %arg3: memref<1x128xf32, #tpu.memory_space<vmem>>, %arg4: memref<1x128xf32, #tpu.memory_space<vmem>>, %arg5: memref<128x384xbf16, #tpu.memory_space<vmem>>, %arg6: memref<1x384xf32, #tpu.memory_space<vmem>>, %arg7: memref<32x384xbf16, #tpu.memory_space<vmem>>, %arg8: memref<32x128xbf16, #tpu.memory_space<vmem>>) attributes {dimension_semantics = [#tpu.dimension_semantics<parallel>, #tpu.dimension_semantics<arbitrary>], iteration_bounds = array<i64: 1, 1>, scalar_prefetch = 0 : i64, scratch_operands = 1 : i64, tpu.core_type = #tpu.core_type<tc>, window_params = [{transform_indices = @transform_0, window_bounds = array<i64: 32, 128>}, {pipeline_mode = #tpu.pipeline_mode<synchronous>, transform_indices = @transform_1, window_bounds = array<i64: 1, 128>}, {pipeline_mode = #tpu.pipeline_mode<synchronous>, transform_indices = @transform_2, window_bounds = array<i64: 1, 128>}, {transform_indices = @transform_3, window_bounds = array<i64: 128, 384>}, {transform_indices = @transform_4, window_bounds = array<i64: 1, 384>}, {transform_indices = @transform_5, window_bounds = array<i64: 32, 384>}]} {
    %c0_i32 = arith.constant 0 : i32
    %0 = arith.cmpi eq, %arg1, %c0_i32 : i32
    %1 = arith.extui %0 : i1 to i32
    %c0_i32_0 = arith.constant 0 : i32
    %2 = arith.cmpi ne, %1, %c0_i32_0 : i32
    scf.if %2 {
      %c0_8 = arith.constant 0 : index
      %c0_9 = arith.constant 0 : index
      %11 = vector.load %arg2[%c0_8, %c0_9] : memref<32x128xf32, #tpu.memory_space<vmem>>, vector<32x128xf32>
      %cst_10 = arith.constant dense<0.000000e+00> : vector<32xf32>
      %12 = vector.multi_reduction <add>, %11, %cst_10 [1] : vector<32x128xf32> to vector<32xf32>
      %13 = vector.shape_cast %12 : vector<32xf32> to vector<32x1xf32>
      %cst_11 = arith.constant 1.280000e+02 : f32
      %14 = vector.broadcast %cst_11 : f32 to vector<32x1xf32>
      %15 = arith.divf %13, %14 : vector<32x1xf32>
      %16 = vector.broadcast %15 : vector<32x1xf32> to vector<32x128xf32>
      %17 = arith.subf %11, %16 : vector<32x128xf32>
      %18 = arith.mulf %17, %17 : vector<32x128xf32>
      %cst_12 = arith.constant dense<0.000000e+00> : vector<32xf32>
      %19 = vector.multi_reduction <add>, %18, %cst_12 [1] : vector<32x128xf32> to vector<32xf32>
      %20 = vector.shape_cast %19 : vector<32xf32> to vector<32x1xf32>
      %cst_13 = arith.constant 1.280000e+02 : f32
      %21 = vector.broadcast %cst_13 : f32 to vector<32x1xf32>
      %22 = arith.divf %20, %21 : vector<32x1xf32>
      %cst_14 = arith.constant 9.99999974E-6 : f32
      %23 = vector.broadcast %cst_14 : f32 to vector<32x1xf32>
      %24 = arith.addf %22, %23 : vector<32x1xf32>
      %25 = math.rsqrt %24 : vector<32x1xf32>
      %26 = vector.broadcast %25 : vector<32x1xf32> to vector<32x128xf32>
      %27 = arith.mulf %17, %26 : vector<32x128xf32>
      %c0_15 = arith.constant 0 : index
      %c0_16 = arith.constant 0 : index
      %28 = vector.load %arg3[%c0_15, %c0_16] : memref<1x128xf32, #tpu.memory_space<vmem>>, vector<1x128xf32>
      %29 = vector.broadcast %28 : vector<1x128xf32> to vector<32x128xf32>
      %30 = arith.mulf %27, %29 : vector<32x128xf32>
      %c0_17 = arith.constant 0 : index
      %c0_18 = arith.constant 0 : index
      %31 = vector.load %arg4[%c0_17, %c0_18] : memref<1x128xf32, #tpu.memory_space<vmem>>, vector<1x128xf32>
      %32 = vector.broadcast %31 : vector<1x128xf32> to vector<32x128xf32>
      %33 = arith.addf %30, %32 : vector<32x128xf32>
      %34 = arith.truncf %33 : vector<32x128xf32> to vector<32x128xbf16>
      %c0_19 = arith.constant 0 : index
      %c0_20 = arith.constant 0 : index
      %35 = vector.load %arg8[%c0_19, %c0_20] : memref<32x128xbf16, #tpu.memory_space<vmem>>, vector<32x128xbf16>
      tpu.vector_store %arg8[%c0_19, %c0_20], %34 {strides = array<i32>} : memref<32x128xbf16, #tpu.memory_space<vmem>>, vector<32x128xbf16>,
    } else {
    }
    %c0 = arith.constant 0 : index
    %c0_1 = arith.constant 0 : index
    %3 = vector.load %arg8[%c0, %c0_1] : memref<32x128xbf16, #tpu.memory_space<vmem>>, vector<32x128xbf16>
    %c0_2 = arith.constant 0 : index
    %c0_3 = arith.constant 0 : index
    %4 = vector.load %arg5[%c0_2, %c0_3] : memref<128x384xbf16, #tpu.memory_space<vmem>>, vector<128x384xbf16>
    %cst = arith.constant dense<0.000000e+00> : vector<32x384xf32>
    %5 = tpu.matmul %3, %4, %cst {dimension_numbers = #tpu.dot_dimension_numbers<[1], [0], [0], [1], [0, 0, 1, 1], [], []>} : vector<32x128xbf16>, vector<128x384xbf16>, vector<32x384xf32> -> vector<32x384xf32>
    %c0_4 = arith.constant 0 : index
    %c0_5 = arith.constant 0 : index
    %6 = vector.load %arg6[%c0_4, %c0_5] : memref<1x384xf32, #tpu.memory_space<vmem>>, vector<1x384xf32>
    %7 = vector.broadcast %6 : vector<1x384xf32> to vector<32x384xf32>
    %8 = arith.addf %5, %7 : vector<32x384xf32>
    %9 = arith.truncf %8 : vector<32x384xf32> to vector<32x384xbf16>
    %c0_6 = arith.constant 0 : index
    %c0_7 = arith.constant 0 : index
    %10 = vector.load %arg7[%c0_6, %c0_7] : memref<32x384xbf16, #tpu.memory_space<vmem>>, vector<32x384xbf16>
    tpu.vector_store %arg7[%c0_6, %c0_7], %9 {strides = array<i32>} : memref<32x384xbf16, #tpu.memory_space<vmem>>, vector<32x384xbf16>,
    return
  }
  func.func @transform_0(%arg0: i32, %arg1: i32) -> (i32, i32) {
    %c0_i32 = arith.constant 0 : i32
    %c0_i32_0 = arith.constant 0 : i32
    return %arg0, %c0_i32 : i32, i32
  }
  func.func @transform_1(%arg0: i32, %arg1: i32) -> (i32, i32) {
    %c0_i32 = arith.constant 0 : i32
    %c0_i32_0 = arith.constant 0 : i32
    %c0_i32_1 = arith.constant 0 : i32
    return %c0_i32, %c0_i32_0 : i32, i32
  }
  func.func @transform_2(%arg0: i32, %arg1: i32) -> (i32, i32) {
    %c0_i32 = arith.constant 0 : i32
    %c0_i32_0 = arith.constant 0 : i32
    %c0_i32_1 = arith.constant 0 : i32
    return %c0_i32, %c0_i32_0 : i32, i32
  }
  func.func @transform_3(%arg0: i32, %arg1: i32) -> (i32, i32) {
    %c0_i32 = arith.constant 0 : i32
    %c0_i32_0 = arith.constant 0 : i32
    return %c0_i32, %arg1 : i32, i32
  }
  func.func @transform_4(%arg0: i32, %arg1: i32) -> (i32, i32) {
    %c0_i32 = arith.constant 0 : i32
    %c0_i32_0 = arith.constant 0 : i32
    return %c0_i32, %arg1 : i32, i32
  }
  func.func @transform_5(%arg0: i32, %arg1: i32) -> (i32, i32) {
    %c0_i32 = arith.constant 0 : i32
    return %arg0, %arg1 : i32, i32
  }
}

</mosaic_0001>

<llo_original>
// kernel: tpu_custom_call.1
$region0: #{tpu_custom_call.1}
  #allocation0 [shape = 'u32[]', space=smem, size = 0x4, offset = 0x4, fixed_abs, tag = 'smem constant byte address 0x4 - core index']
  #allocation1 [shape = 'u32[144,128]{1,0:T(1,128)}', space=vmem, size = 0x12000, scoped, tag = 'internal scratch']
  #allocation2 [shape = 'bf16[32,128]{1,0:T(16,128)(2,1)}', space=vmem, size = 0x2000, scoped, tag = 'scratch operand']
  %s0 = inlined_call_operand.hbm [shape: f32[32,128], index: 0, kind: input, shape index: {}]
  %s1 = inlined_call_operand.vmem [shape: f32[1,128], index: 1, kind: input, shape index: {}]
  %s2 = inlined_call_operand.vmem [shape: f32[1,128], index: 2, kind: input, shape index: {}]
  %s3 = inlined_call_operand.hbm [shape: bf16[128,384], index: 3, kind: input, shape index: {}]
  %s4 = inlined_call_operand.vmem [shape: f32[1,384], index: 4, kind: input, shape index: {}]
  %s5 = inlined_call_operand.hbm [shape: bf16[32,384], index: 5, kind: output, shape index: {}]
  %s6 = sld [smem:[#allocation0]]
  $region42: #{tpu_custom_call.1} parent=0
    _
  %s8 = ssub.s32 1, %s6
  %s9 = scalar_select 0, %s8, %s6
  $region1: #{tpu_custom_call.1} parent=0
    #allocation3 [shape = 'u8[16384]{0}', space=vmem, size = 0x4000, scoped, tag = 'input window, operand 0, single buffered']
    #allocation4 [shape = 's32[1]{0}', space=sflag, size = 0x4, scoped, tag = 'scoped memory for tpu_custom_call.1']
    #allocation5 [shape = 's32[1]{0}', space=sflag, size = 0x4, scoped, tag = 'scoped memory for tpu_custom_call.1']
    #allocation6 [shape = 'u8[98304]{0}', space=vmem, size = 0x18000, scoped, tag = 'input window, operand 3, single buffered']
    #allocation7 [shape = 's32[1]{0}', space=sflag, size = 0x4, scoped, tag = 'scoped memory for tpu_custom_call.1']
    #allocation8 [shape = 'u8[24576]{0}', space=vmem, size = 0x6000, scoped, tag = 'output window, operand 0, single buffered']
    %10 = vsyncpa [#allocation4], 0
    %11 = vsyncpa [#allocation7], 0
    %12 = vsyncpa [#allocation5], 0
    // Predicated region
    $region2: #{tpu_custom_call.1} parent=1 // pred_check
      _
    $region3: #{tpu_custom_call.1} parent=1 // pred_check_branch
      %14 = sbr.rel (0) target = $region5
    $region4: #{tpu_custom_call.1} parent=1 // pred_region
      %s16 = ssub.s32 512, 512
      %17 = vsyncadd [#allocation4], %s16
      %s18 = sshll.u32 [#allocation3], 4
      %s19 = int_to_ptr.vmem [resolvable:$true] %s18
      %24 = dma.hbm_to_vmem [thread:$0]  %s0, 512, %s19, [#allocation4], 128, 128, 8
    $region5: #{tpu_custom_call.1} parent=1 // pred_fallthru
      _
    // Predicated region
    $region6: #{tpu_custom_call.1} parent=1 // pred_check
      _
    $region7: #{tpu_custom_call.1} parent=1 // pred_check_branch
      %26 = sbr.rel (0) target = $region9
    $region8: #{tpu_custom_call.1} parent=1 // pred_region
      _
    $region9: #{tpu_custom_call.1} parent=1 // pred_fallthru
      _
    // Predicated region
    $region10: #{tpu_custom_call.1} parent=1 // pred_check
      _
    $region11: #{tpu_custom_call.1} parent=1 // pred_check_branch
      %28 = sbr.rel (0) target = $region13
    $region12: #{tpu_custom_call.1} parent=1 // pred_region
      _
    $region13: #{tpu_custom_call.1} parent=1 // pred_fallthru
      _
    // Predicated region
    $region14: #{tpu_custom_call.1} parent=1 // pred_check
      _
    $region15: #{tpu_custom_call.1} parent=1 // pred_check_branch
      %30 = sbr.rel (0) target = $region17
    $region16: #{tpu_custom_call.1} parent=1 // pred_region
      %s32 = ssub.s32 3072, 3072
      %33 = vsyncadd [#allocation7], %s32
      %s34 = sshll.u32 [#allocation6], 4
      %s35 = int_to_ptr.vmem [resolvable:$true] %s34
      %40 = dma.hbm_to_vmem [thread:$0]  %s3, 3072, %s35, [#allocation7], 192, 192, 12
    $region17: #{tpu_custom_call.1} parent=1 // pred_fallthru
      _
    // Predicated region
    $region18: #{tpu_custom_call.1} parent=1 // pred_check
      _
    $region19: #{tpu_custom_call.1} parent=1 // pred_check_branch
      %42 = sbr.rel (0) target = $region21
    $region20: #{tpu_custom_call.1} parent=1 // pred_region
      _
    $region21: #{tpu_custom_call.1} parent=1 // pred_fallthru
      _
    // Predicated region
    $region22: #{tpu_custom_call.1} parent=1 // pred_check
      _
    $region23: #{tpu_custom_call.1} parent=1 // pred_check_branch
      %44 = sbr.rel (0) target = $region25
    $region24: #{tpu_custom_call.1} parent=1 // pred_region
      %45 = dma.done [#allocation4], 512
    $region25: #{tpu_custom_call.1} parent=1 // pred_fallthru
      _
    // Predicated region
    $region26: #{tpu_custom_call.1} parent=1 // pred_check
      _
    $region27: #{tpu_custom_call.1} parent=1 // pred_check_branch
      %47 = sbr.rel (0) target = $region29
    $region28: #{tpu_custom_call.1} parent=1 // pred_region
      %48 = dma.done [#allocation7], 3072
    $region29: #{tpu_custom_call.1} parent=1 // pred_fallthru
      _
    %p50 = scmp.eq.s32.totalorder 0, 0
    // Predicated region
    $region30: #{tpu_custom_call.1} parent=1 // pred_check
      %p51 = pneg %p50
    $region31: #{tpu_custom_call.1} parent=1 // pred_check_branch
      %53 = sbr.rel (%p51) target = $region33
    $region32: #{tpu_custom_call.1} parent=1 // pred_region
      %v54 = vld [vmem:[#allocation3] sm:$0xff]
      %v55 = vld [vmem:[#allocation3 + $0x8] sm:$0xff]
      %v56 = vld [vmem:[#allocation3 + $0x10] sm:$0xff]
      %v57 = vld [vmem:[#allocation3 + $0x18] sm:$0xff]
      %58 = vadd.xlane.f32.xlu0 %v54
      %v59 = vpop.xlane.xlu0 %58
      %60 = vadd.xlane.f32.xlu0 %v55
      %v61 = vpop.xlane.xlu0 %60
      %62 = vadd.xlane.f32.xlu0 %v56
      %v63 = vpop.xlane.xlu0 %62
      %64 = vadd.xlane.f32.xlu0 %v57
      %v65 = vpop.xlane.xlu0 %64
      %v66 = vrcp.pop 128.0
      %v67 = vmul.f32 %v59, %v66
      %v68 = vmul.f32 %v61, %v66
      %v69 = vmul.f32 %v63, %v66
      %v70 = vmul.f32 %v65, %v66
      %v71 = vsub.f32 %v54, %v67
      %v72 = vsub.f32 %v55, %v68
      %v73 = vsub.f32 %v56, %v69
      %v74 = vsub.f32 %v57, %v70
      %v75 = vmul.f32 %v71, %v71
      %v76 = vmul.f32 %v72, %v72
      %v77 = vmul.f32 %v73, %v73
      %v78 = vmul.f32 %v74, %v74
      %79 = vadd.xlane.f32.xlu0 %v75
      %v80 = vpop.xlane.xlu0 %79
      %81 = vadd.xlane.f32.xlu0 %v76
      %v82 = vpop.xlane.xlu0 %81
      %83 = vadd.xlane.f32.xlu0 %v77
      %v84 = vpop.xlane.xlu0 %83
      %85 = vadd.xlane.f32.xlu0 %v78
      %v86 = vpop.xlane.xlu0 %85
      %v87 = vmul.f32 %v80, %v66
      %v88 = vmul.f32 %v82, %v66
      %v89 = vmul.f32 %v84, %v66
      %v90 = vmul.f32 %v86, %v66
      %v91 = vadd.f32 %v87, 1e-05
      %v92 = vadd.f32 %v88, 1e-05
      %v93 = vadd.f32 %v89, 1e-05
      %v94 = vadd.f32 %v90, 1e-05
      %v95 = vrsqrt.pop %v91
      %v96 = vrsqrt.pop %v92
      %v97 = vrsqrt.pop %v93
      %v98 = vrsqrt.pop %v94
      %v99 = vmul.f32 %v71, %v95
      %v100 = vmul.f32 %v72, %v96
      %v101 = vmul.f32 %v73, %v97
      %v102 = vmul.f32 %v74, %v98
      %v103 = vld [vmem:[%s1] sm:$0x1]
      %v105 = vlaneseq
      %v106 = vshrl.u32 %v105, 7
      %v107 = vsub.s32 0, %v106
      %v108 = vrot.slane %v103, %v107
      %v110 = vmul.f32 %v99, %v108
      %v111 = vmul.f32 %v100, %v108
      %v112 = vmul.f32 %v101, %v108
      %v113 = vmul.f32 %v102, %v108
      %v114 = vld [vmem:[%s2] sm:$0x1]
      %v116 = vlaneseq
      %v117 = vshrl.u32 %v116, 7
      %v118 = vsub.s32 0, %v117
      %v119 = vrot.slane %v114, %v118
      %v121 = vadd.f32 %v110, %v119
      %v122 = vadd.f32 %v111, %v119
      %v123 = vadd.f32 %v112, %v119
      %v124 = vadd.f32 %v113, %v119
      %v125 = vpack.c.bf16 %v122, %v121
      %v126 = vpack.c.bf16 %v124, %v123
      %127 = vst [vmem:[#allocation2] sm:$0xff] %v125
      %128 = vst [vmem:[#allocation2 + $0x8] sm:$0xff] %v126
    $region33: #{tpu_custom_call.1} parent=1 // pred_fallthru
      _
    %v129 = vld [vmem:[#allocation2] sm:$0xff]
    %v130 = vld [vmem:[#allocation2 + $0x8] sm:$0xff]
    %v131 = vld [vmem:[#allocation6] sm:$0xff]
    %v132 = vld [vmem:[#allocation6 + $0x8] sm:$0xf]
    %v133 = vld [vmem:[#allocation6 + $0xc] sm:$0xff]
    %v134 = vld [vmem:[#allocation6 + $0x14] sm:$0xf]
    %v135 = vld [vmem:[#allocation6 + $0x18] sm:$0xff]
    %v136 = vld [vmem:[#allocation6 + $0x20] sm:$0xf]
    %v137 = vld [vmem:[#allocation6 + $0x24] sm:$0xff]
    %v138 = vld [vmem:[#allocation6 + $0x2c] sm:$0xf]
    %v139 = vld [vmem:[#allocation6 + $0x30] sm:$0xff]
    %v140 = vld [vmem:[#allocation6 + $0x38] sm:$0xf]
    %v141 = vld [vmem:[#allocation6 + $0x3c] sm:$0xff]
    %v142 = vld [vmem:[#allocation6 + $0x44] sm:$0xf]
    %v143 = vld [vmem:[#allocation6 + $0x48] sm:$0xff]
    %v144 = vld [vmem:[#allocation6 + $0x50] sm:$0xf]
    %v145 = vld [vmem:[#allocation6 + $0x54] sm:$0xff]
    %v146 = vld [vmem:[#allocation6 + $0x5c] sm:$0xf]
    %v147 = vld [vmem:[#allocation6 + $0x60] sm:$0xff]
    %v148 = vld [vmem:[#allocation6 + $0x68] sm:$0xf]
    %v149 = vld [vmem:[#allocation6 + $0x6c] sm:$0xff]
    %v150 = vld [vmem:[#allocation6 + $0x74] sm:$0xf]
    %v151 = vld [vmem:[#allocation6 + $0x78] sm:$0xff]
    %v152 = vld [vmem:[#allocation6 + $0x80] sm:$0xf]
    %v153 = vld [vmem:[#allocation6 + $0x84] sm:$0xff]
    %v154 = vld [vmem:[#allocation6 + $0x8c] sm:$0xf]
    %v155 = vld [vmem:[#allocation6 + $0x90] sm:$0xff]
    %v156 = vld [vmem:[#allocation6 + $0x98] sm:$0xf]
    %v157 = vld [vmem:[#allocation6 + $0x9c] sm:$0xff]
    %v158 = vld [vmem:[#allocation6 + $0xa4] sm:$0xf]
    %v159 = vld [vmem:[#allocation6 + $0xa8] sm:$0xff]
    %v160 = vld [vmem:[#allocation6 + $0xb0] sm:$0xf]
    %v161 = vld [vmem:[#allocation6 + $0xb4] sm:$0xff]
    %v162 = vld [vmem:[#allocation6 + $0xbc] sm:$0xf]
    %v163 = vld [vmem:[%s4] sm:$0x7]
    %v165 = vlaneseq
    %v166 = vshrl.u32 %v165, 7
    %v167 = vsub.s32 0, %v166
    %v168 = vrot.slane %v163, %v167
    %v169 = vlaneseq
    %v170 = vshrl.u32 %v169, 7
    %v171 = vsub.s32 1, %v170
    %v172 = vrot.slane %v163, %v171
    %v173 = vlaneseq
    %v174 = vshrl.u32 %v173, 7
    %v175 = vsub.s32 2, %v174
    %v176 = vrot.slane %v163, %v175
    %v212 = vunpack.c.l.b16 %v131
    %v213 = vunpack.c.h.b16 %v131
    %v214 = vunpack.c.l.b16 %v132
    %v215 = vunpack.c.l.b16 %v133
    %v216 = vunpack.c.h.b16 %v133
    %v217 = vunpack.c.l.b16 %v134
    %v218 = vunpack.c.l.b16 %v135
    %v219 = vunpack.c.h.b16 %v135
    %v220 = vunpack.c.l.b16 %v136
    %v221 = vunpack.c.l.b16 %v137
    %v222 = vunpack.c.h.b16 %v137
    %v223 = vunpack.c.l.b16 %v138
    %v224 = vunpack.c.l.b16 %v139
    %v225 = vunpack.c.h.b16 %v139
    %v226 = vunpack.c.l.b16 %v140
    %v227 = vunpack.c.l.b16 %v141
    %v228 = vunpack.c.h.b16 %v141
    %v229 = vunpack.c.l.b16 %v142
    %v230 = vunpack.c.l.b16 %v143
    %v231 = vunpack.c.h.b16 %v143
    %v232 = vunpack.c.l.b16 %v144
    %v233 = vunpack.c.l.b16 %v145
    %v234 = vunpack.c.h.b16 %v145
    %v235 = vunpack.c.l.b16 %v146
    %v236 = vunpack.c.l.b16 %v147
    %v237 = vunpack.c.h.b16 %v147
    %v238 = vunpack.c.l.b16 %v148
    %v239 = vunpack.c.l.b16 %v149
    %v240 = vunpack.c.h.b16 %v149
    %v241 = vunpack.c.l.b16 %v150
    %v242 = vunpack.c.l.b16 %v151
    %v243 = vunpack.c.h.b16 %v151
    %v244 = vunpack.c.l.b16 %v152
    %v245 = vunpack.c.l.b16 %v153
    %v246 = vunpack.c.h.b16 %v153
    %v247 = vunpack.c.l.b16 %v154
    %v248 = vunpack.c.l.b16 %v155
    %v249 = vunpack.c.h.b16 %v155
    %v250 = vunpack.c.l.b16 %v156
    %v251 = vunpack.c.l.b16 %v157
    %v252 = vunpack.c.h.b16 %v157
    %v253 = vunpack.c.l.b16 %v158
    %v254 = vunpack.c.l.b16 %v159
    %v255 = vunpack.c.h.b16 %v159
    %v256 = vunpack.c.l.b16 %v160
    %v257 = vunpack.c.l.b16 %v161
    %v258 = vunpack.c.h.b16 %v161
    %v259 = vunpack.c.l.b16 %v162
    %v260 = vpack.c.b16 %v215, %v212
    %v261 = vpack.c.b16 %v216, %v213
    %v262 = vpack.c.b16 %v217, %v214
    %v263 = vpack.c.b16 %v221, %v218
    %v264 = vpack.c.b16 %v222, %v219
    %v265 = vpack.c.b16 %v223, %v220
    %v266 = vpack.c.b16 %v227, %v224
    %v267 = vpack.c.b16 %v228, %v225
    %v268 = vpack.c.b16 %v229, %v226
    %v269 = vpack.c.b16 %v233, %v230
    %v270 = vpack.c.b16 %v234, %v231
    %v271 = vpack.c.b16 %v235, %v232
    %v272 = vpack.c.b16 %v239, %v236
    %v273 = vpack.c.b16 %v240, %v237
    %v274 = vpack.c.b16 %v241, %v238
    %v275 = vpack.c.b16 %v245, %v242
    %v276 = vpack.c.b16 %v246, %v243
    %v277 = vpack.c.b16 %v247, %v244
    %v278 = vpack.c.b16 %v251, %v248
    %v279 = vpack.c.b16 %v252, %v249
    %v280 = vpack.c.b16 %v253, %v250
    %v281 = vpack.c.b16 %v257, %v254
    %v282 = vpack.c.b16 %v258, %v255
    %v283 = vpack.c.b16 %v259, %v256
    %308 = vmatprep.subr.bf16.mxu0 %v261
    %309 = vmatpush1.bf16.msra.mxu0 %v260
    %310 = vmatprep.subr.bf16.mxu0 %v264
    %311 = vmatpush1.bf16.msra.mxu0 %v263
    %312 = vmatprep.subr.bf16.mxu0 %v267
    %313 = vmatpush1.bf16.msra.mxu0 %v266
    %314 = vmatprep.subr.bf16.mxu0 %v270
    %315 = vmatpush1.bf16.msra.mxu0 %v269
    %316 = vmatprep.subr.bf16.mxu0 %v273
    %317 = vmatpush1.bf16.msra.mxu0 %v272
    %318 = vmatprep.subr.bf16.mxu0 %v276
    %319 = vmatpush1.bf16.msra.mxu0 %v275
    %320 = vmatprep.subr.bf16.mxu0 %v279
    %321 = vmatpush1.bf16.msra.mxu0 %v278
    %322 = vmatprep.subr.bf16.mxu0 %v282
    %323 = vmatpush1.bf16.msra.mxu0 %v281
    %324 = vmatprep.subr.bf16.mxu0 0
    %325 = vmatpush1.bf16.msra.mxu0 0
    %326 = vmatprep.subr.bf16.mxu0 0
    %327 = vmatpush1.bf16.msra.mxu0 0
    %328 = vmatprep.subr.bf16.mxu0 0
    %329 = vmatpush1.bf16.msra.mxu0 0
    %330 = vmatprep.subr.bf16.mxu0 0
    %331 = vmatpush1.bf16.msra.mxu0 0
    %332 = vmatprep.subr.bf16.mxu0 0
    %333 = vmatpush1.bf16.msra.mxu0 0
    %334 = vmatprep.subr.bf16.mxu0 0
    %335 = vmatpush1.bf16.msra.mxu0 0
    %336 = vmatprep.subr.bf16.mxu0 0
    %337 = vmatpush1.bf16.msra.mxu0 0
    %338 = vmatprep.subr.bf16.mxu0 0
    %339 = vmatpush1.bf16.msra.mxu0 0
    %340 = vmatprep.mubr.bf16.mxu0 0
    %341 = vmatmul.mubr.bf16.gmra.mrb[0].mxu0 %v129
    %v342 = vpop.f32.mrb[0].mxu0
    %v343 = vadd.f32 %v168, %v342
    %v344 = vpop.f32.mrb[0].mxu0
    %v345 = vadd.f32 %v172, %v344
    %v346 = vpop.f32.mrb[0].mxu0
    %v347 = vadd.f32 %v168, %v346
    %v348 = vpop.f32.mrb[0].mxu0
    %v349 = vadd.f32 %v172, %v348
    %350 = vmatprep.mubr.bf16.mxu0 0
    %351 = vmatmul.mubr.bf16.gmra.mrb[0].mxu0 %v130
    %v352 = vpop.f32.mrb[0].mxu0
    %v353 = vadd.f32 %v168, %v352
    %v354 = vpop.f32.mrb[0].mxu0
    %v355 = vadd.f32 %v172, %v354
    %v356 = vpop.f32.mrb[0].mxu0
    %v357 = vadd.f32 %v168, %v356
    %v358 = vpop.f32.mrb[0].mxu0
    %v359 = vadd.f32 %v172, %v358
    %360 = vdwg.mxu0
    %361 = vmatprep.subr.bf16.mxu0 0
    %362 = vmatpush1.bf16.msra.mxu0 %v262
    %363 = vmatprep.subr.bf16.mxu0 0
    %364 = vmatpush1.bf16.msra.mxu0 %v265
    %365 = vmatprep.subr.bf16.mxu0 0
    %366 = vmatpush1.bf16.msra.mxu0 %v268
    %367 = vmatprep.subr.bf16.mxu0 0
    %368 = vmatpush1.bf16.msra.mxu0 %v271
    %369 = vmatprep.subr.bf16.mxu0 0
    %370 = vmatpush1.bf16.msra.mxu0 %v274
    %371 = vmatprep.subr.bf16.mxu0 0
    %372 = vmatpush1.bf16.msra.mxu0 %v277
    %373 = vmatprep.subr.bf16.mxu0 0
    %374 = vmatpush1.bf16.msra.mxu0 %v280
    %375 = vmatprep.subr.bf16.mxu0 0
    %376 = vmatpush1.bf16.msra.mxu0 %v283
    %377 = vmatprep.subr.bf16.mxu0 0
    %378 = vmatpush1.bf16.msra.mxu0 0
    %379 = vmatprep.subr.bf16.mxu0 0
    %380 = vmatpush1.bf16.msra.mxu0 0
    %381 = vmatprep.subr.bf16.mxu0 0
    %382 = vmatpush1.bf16.msra.mxu0 0
    %383 = vmatprep.subr.bf16.mxu0 0
    %384 = vmatpush1.bf16.msra.mxu0 0
    %385 = vmatprep.subr.bf16.mxu0 0
    %386 = vmatpush1.bf16.msra.mxu0 0
    %387 = vmatprep.subr.bf16.mxu0 0
    %388 = vmatpush1.bf16.msra.mxu0 0
    %389 = vmatprep.subr.bf16.mxu0 0
    %390 = vmatpush1.bf16.msra.mxu0 0
    %391 = vmatprep.subr.bf16.mxu0 0
    %392 = vmatpush1.bf16.msra.mxu0 0
    %393 = vmatprep.mubr.bf16.mxu0 0
    %394 = vmatmul.mubr.bf16.gmra.mrb[0].mxu0 %v129
    %v395 = vpop.f32.mrb[0].mxu0
    %v396 = vadd.f32 %v176, %v395
    %v397 = vpop.f32.mrb[0].mxu0
    %v398 = vpop.f32.mrb[0].mxu0
    %v399 = vadd.f32 %v176, %v398
    %v400 = vpop.f32.mrb[0].mxu0
    %401 = vmatprep.mubr.bf16.mxu0 0
    %402 = vmatmul.mubr.bf16.gmra.mrb[0].mxu0 %v130
    %v403 = vpop.f32.mrb[0].mxu0
    %v404 = vadd.f32 %v176, %v403
    %v405 = vpop.f32.mrb[0].mxu0
    %v406 = vpop.f32.mrb[0].mxu0
    %v407 = vadd.f32 %v176, %v406
    %v408 = vpop.f32.mrb[0].mxu0
    %409 = vdwg.mxu0
    %v410 = vpack.c.bf16 %v347, %v343
    %v411 = vpack.c.bf16 %v349, %v345
    %v412 = vpack.c.bf16 %v399, %v396
    %v413 = vpack.c.bf16 %v357, %v353
    %v414 = vpack.c.bf16 %v359, %v355
    %v415 = vpack.c.bf16 %v407, %v404
    %v422 = vunpack.c.l.b16 %v410
    %v423 = vunpack.c.l.b16 %v411
    %v424 = vunpack.c.l.b16 %v412
    %v425 = vunpack.c.h.b16 %v410
    %v426 = vunpack.c.h.b16 %v411
    %v427 = vunpack.c.h.b16 %v412
    %v428 = vunpack.c.l.b16 %v413
    %v429 = vunpack.c.l.b16 %v414
    %v430 = vunpack.c.l.b16 %v415
    %v431 = vunpack.c.h.b16 %v413
    %v432 = vunpack.c.h.b16 %v414
    %v433 = vunpack.c.h.b16 %v415
    %v434 = vpack.c.b16 %v423, %v422
    %v435 = vpack.c.b16 %v424, %v424
    %v436 = vpack.c.b16 %v426, %v425
    %v437 = vpack.c.b16 %v427, %v427
    %v438 = vpack.c.b16 %v429, %v428
    %v439 = vpack.c.b16 %v430, %v430
    %v440 = vpack.c.b16 %v432, %v431
    %v441 = vpack.c.b16 %v433, %v433
    %450 = vst [vmem:[#allocation8] sm:$0xff] %v434
    %451 = vst [vmem:[#allocation8 + $0x8] sm:$0xf] %v435
    %452 = vst [vmem:[#allocation8 + $0xc] sm:$0xff] %v436
    %453 = vst [vmem:[#allocation8 + $0x14] sm:$0xf] %v437
    %454 = vst [vmem:[#allocation8 + $0x18] sm:$0xff] %v438
    %455 = vst [vmem:[#allocation8 + $0x20] sm:$0xf] %v439
    %456 = vst [vmem:[#allocation8 + $0x24] sm:$0xff] %v440
    %457 = vst [vmem:[#allocation8 + $0x2c] sm:$0xf] %v441
    // Predicated region
    $region34: #{tpu_custom_call.1} parent=1 // pred_check
      _
    $region35: #{tpu_custom_call.1} parent=1 // pred_check_branch
      %459 = sbr.rel (0) target = $region37
    $region36: #{tpu_custom_call.1} parent=1 // pred_region
      %s461 = ssub.s32 768, 768
      %462 = vsyncadd [#allocation5], %s461
      %s463 = sshll.u32 [#allocation8], 4
      %s464 = int_to_ptr.vmem [resolvable:$true] %s463
      %469 = dma.vmem_to_hbm [thread:$0]  %s464, 768, %s5, [#allocation5], 192, 192, 12
    $region37: #{tpu_custom_call.1} parent=1 // pred_fallthru
      _
    // Predicated region
    $region38: #{tpu_custom_call.1} parent=1 // pred_check
      _
    $region39: #{tpu_custom_call.1} parent=1 // pred_check_branch
      %471 = sbr.rel (0) target = $region41
    $region40: #{tpu_custom_call.1} parent=1 // pred_region
      %472 = dma.done [#allocation5], 768
    $region41: #{tpu_custom_call.1} parent=1 // pred_fallthru
      _
    %473 = vsyncpa [#allocation4], 1
    %474 = vsyncpa [#allocation7], 1
    %475 = vsyncpa [#allocation5], 1

</llo_original>
